<compile_context>
chip_gen: v7x
topology: tpu7x:2x2x1
jax: 0.10.0
libtpu: 0.0.40
codegen_flags: <defaults>
</compile_context>

<pallas_src>
import jax
import jax.numpy as jnp
from jax.experimental import pallas as pl
from jax.experimental.pallas import tpu as pltpu

_LANE = 128


def _round_up(v, m):
    return ((v + m - 1) // m) * m


def _bn_affine(gamma, beta, mean, var, eps=1e-5):
    scale = gamma / jnp.sqrt(var + eps)
    bias = beta - mean * scale
    return scale[None, :], bias[None, :]


# --------------------------------------------------------------------------
# Kernel 1: fused per-point dense path.
#   y   = relu(x @ w1_folded + b1)              (bn1 folded, y never stored)
#   qkv = y @ [wq|pad | wk|pad | wv|pad] + bias  (each segment 128-lane aligned)
# One lane-dense (tile_n, 3*cpad) output slab in the compute dtype.
# --------------------------------------------------------------------------
def _qkv_kernel(x_ref, w1_ref, b1_ref, wqkv_ref, bqkv_ref, qkv_ref):
    x = x_ref[...]
    y = jnp.maximum(
        jnp.dot(x.astype(w1_ref.dtype), w1_ref[...],
                preferred_element_type=jnp.float32) + b1_ref[...], 0.0)
    qkv = (jnp.dot(y.astype(wqkv_ref.dtype), wqkv_ref[...],
                   preferred_element_type=jnp.float32) + bqkv_ref[...])
    qkv_ref[...] = qkv.astype(qkv_ref.dtype)


# --------------------------------------------------------------------------
# Kernel 2: in-kernel neighbor gather (one-hot on the MXU from the
# VMEM-resident QKV / point tables), linear_p, linear_w, softmax over nsample
# at width cs, grouped weighted aggregation, and the block epilogue
# (bn2+relu, linear3(+bn3 folded), residual add, relu).
# --------------------------------------------------------------------------
def _attn_kernel(idx_ref, qkv_ref, pall_ref, pcen_ref, xid_ref,
                 wp1_ref, bp1_ref, wp2_ref, bp2_ref,
                 bnw1_s_ref, bnw1_b_ref, ww1_ref, bw1_ref, ww2_ref, bw2_ref,
                 expand_ref, bn2_s_ref, bn2_b_ref, w3_ref, b3_ref,
                 out_ref):
    Tn = pcen_ref.shape[0]
    ns = idx_ref.shape[0] // Tn
    C = bn2_s_ref.shape[-1]
    cs = ww1_ref.shape[-1]
    Npts, width = qkv_ref.shape
    cpad = width // 3

    def small_mm(a, b, bias):
        # (M, K) @ (K, Nout) with tiny K (3 or cs): VPU broadcast-FMA expansion.
        out = a[:, 0:1] * b[0:1, :] + bias
        for j in range(1, b.shape[0]):
            out = out + a[:, j:j + 1] * b[j:j + 1, :]
        return out

    # ---- in-kernel neighbor gather (one-hot @ resident tables on the MXU) ----
    idx = idx_ref[...]                                             # (Tn*ns, 1) int32
    col = jax.lax.broadcasted_iota(jnp.int32, (Tn * ns, Npts), 1)
    onehot = (idx == col).astype(jnp.float32)                      # (Tn*ns, N)
    kv = jnp.dot(onehot.astype(qkv_ref.dtype), qkv_ref[:, cpad:3 * cpad],
                 preferred_element_type=jnp.float32)               # (Tn*ns, 2*cpad)
    xk_g = kv[:, 0:C].reshape(Tn, ns, C)
    xv_g = kv[:, cpad:cpad + C].reshape(Tn, ns, C)
    p_g = jnp.dot(onehot, pall_ref[...],
                  preferred_element_type=jnp.float32)              # (Tn*ns, 3)

    # ---- relative coordinates + linear_p (BN folded into the first Linear) ----
    p_r = p_g.reshape(Tn, ns, 3) - pcen_ref[...][:, None, :]
    pr2 = p_r.reshape(Tn * ns, 3)
    h = jnp.maximum(small_mm(pr2, wp1_ref[...], bp1_ref[...]), 0.0)
    p_emb = small_mm(h, wp2_ref[...], bp2_ref[...])                # (Tn*ns, C)
    p_emb3 = p_emb.reshape(Tn, ns, C)

    # ---- x_q for this tile: aligned slice of the resident QKV table ----------
    row0 = pl.multiple_of(pl.program_id(0) * Tn, Tn)
    xq = qkv_ref[pl.ds(row0, Tn), 0:C].astype(jnp.float32)         # (Tn, C)

    # ---- w = x_k - x_q + p_r ; linear_w (BN#2 folded), logits at width cs ----
    w = xk_g - xq[:, None, :] + p_emb3                             # (Tn, ns, C)
    w = jnp.maximum(w * bnw1_s_ref[...].reshape(1, 1, C)
                    + bnw1_b_ref[...].reshape(1, 1, C), 0.0)
    w2d = jnp.dot(w.reshape(Tn * ns, C).astype(ww1_ref.dtype), ww1_ref[...],
                  preferred_element_type=jnp.float32) + bw1_ref[...]
    w2d = jnp.maximum(w2d, 0.0)                                    # (Tn*ns, cs)
    if cs >= 16:
        logits = jnp.dot(w2d, ww2_ref[...],
                         preferred_element_type=jnp.float32) + bw2_ref[...]
    else:
        logits = small_mm(w2d, ww2_ref[...], bw2_ref[...])
    logits = logits.reshape(Tn, ns, cs)

    # ---- softmax over nsample at width cs (EUP reciprocal) -------------------
    logits = logits - jnp.max(logits, axis=1, keepdims=True)
    e = jnp.exp(logits)
    attn = e * pl.reciprocal(jnp.sum(e, axis=1, keepdims=True), approx=True)

    # ---- share-planes channel repeat applied post-softmax on the MXU ---------
    attn_full = jnp.dot(attn.reshape(Tn * ns, cs), expand_ref[...],
                        preferred_element_type=jnp.float32).reshape(Tn, ns, C)
    agg = jnp.sum((xv_g + p_emb3) * attn_full, axis=1)             # (Tn, C)

    # ---- bn2+relu, linear3 (bn3 folded), residual, relu ----------------------
    agg = jnp.maximum(agg * bn2_s_ref[...] + bn2_b_ref[...], 0.0)
    out = jnp.dot(agg.astype(w3_ref.dtype), w3_ref[...],
                  preferred_element_type=jnp.float32) + b3_ref[...]
    out_ref[...] = jnp.maximum(out + xid_ref[...], 0.0)


# --------------------------------------------------------------------------
# Host-side parameter folding (inference-mode BN, aligned QKV segments, dtype)
# --------------------------------------------------------------------------
def _fold_params(prm, share_planes, compute_dtype):
    C = prm["w1"].shape[1]
    cs = C // share_planes
    cpad = _round_up(C, _LANE)
    cd = compute_dtype

    def seg(a):
        return jnp.pad(a, ((0, 0), (0, cpad - C)))

    fp = {}
    fp["w1f"] = (prm["w1"] * prm["bn1_s"]).astype(cd)              # bn1 folded
    fp["b1f"] = prm["bn1_b"]
    fp["wqkv"] = jnp.concatenate(
        [seg(prm["wq"]), seg(prm["wk"]), seg(prm["wv"])], axis=1).astype(cd)
    fp["bqkv"] = jnp.concatenate(
        [seg(prm["bq"]), seg(prm["bk"]), seg(prm["bv"])], axis=1)

    fp["wp1f"] = prm["wp1"] * prm["bnp_s"]                         # linear_p BN folded
    fp["bp1f"] = prm["bp1"] * prm["bnp_s"] + prm["bnp_b"]
    fp["wp2"] = prm["wp2"]
    fp["bp2"] = prm["bp2"]

    fp["bnw1_s"] = prm["bnw1_s"]
    fp["bnw1_b"] = prm["bnw1_b"]
    fp["ww1f"] = (prm["ww1"] * prm["bnw2_s"]).astype(cd)           # linear_w BN#2 folded
    fp["bw1f"] = prm["bw1"] * prm["bnw2_s"] + prm["bnw2_b"]
    fp["ww2"] = prm["ww2"]
    fp["bw2"] = prm["bw2"]
    # share-planes repeat (channel c -> c % cs), applied AFTER the softmax
    fp["expand"] = jnp.tile(jnp.eye(cs, dtype=jnp.float32), (1, share_planes))

    fp["bn2_s"] = prm["bn2_s"]
    fp["bn2_b"] = prm["bn2_b"]
    fp["w3f"] = (prm["w3"] * prm["bn3_s"]).astype(cd)              # bn3 folded
    fp["b3f"] = prm["bn3_b"]
    return fp, cpad


def _knn_idx(p, nsample):
    # pointops.queryandgroup kNN (self first): |p|^2 + |p'|^2 - 2 p@p^T on the
    # MXU + top_k; the diagonal is forced most-negative so the query point is
    # always its own first neighbor.
    # TODO(synk): segment-offset (o) masking and blocked top-k for large N.
    n = p.shape[0]
    pn2 = jnp.sum(p * p, axis=-1)
    d2 = pn2[:, None] + pn2[None, :] - 2.0 * (p @ p.T)
    d2 = d2 - 1e9 * jnp.eye(n, dtype=d2.dtype)
    _, idx = jax.lax.top_k(-d2, nsample)
    return idx.astype(jnp.int32)


# --------------------------------------------------------------------------
# Wrapper
# --------------------------------------------------------------------------
def point_transformer_block(p, x, o, params, *, share_planes, nsample, tile_n,
                            compute_dtype=jnp.float32,
                            vmem_limit_bytes=64 * 1024 * 1024):
    N, Cin = x.shape
    C = params["w1"].shape[1]
    assert Cin == C and C % share_planes == 0
    assert N % tile_n == 0 and tile_n % 8 == 0
    fp, cpad = _fold_params(params, share_planes, compute_dtype)
    grid = (N // tile_n,)

    def row_spec(c):
        return pl.BlockSpec((tile_n, c), lambda i: (i, 0))

    def full_spec(a):
        return pl.BlockSpec(a.shape, lambda i, nd=a.ndim: (0,) * nd)

    cparams = pltpu.CompilerParams(
        dimension_semantics=("parallel",),
        vmem_limit_bytes=vmem_limit_bytes)

    # ---- pass 1: fused linear1(+bn1)+relu and q/k/v projections --------------
    qkv_names = ("w1f", "b1f", "wqkv", "bqkv")
    qkv = pl.pallas_call(
        _qkv_kernel,
        grid=grid,
        in_specs=[row_spec(Cin)] + [full_spec(fp[k]) for k in qkv_names],
        out_specs=pl.BlockSpec((tile_n, 3 * cpad), lambda i: (i, 0)),
        out_shape=jax.ShapeDtypeStruct((N, 3 * cpad), compute_dtype),
        compiler_params=cparams,
    )(x, *[fp[k] for k in qkv_names])

    # ---- kNN indices (plain JAX glue for pointops.queryandgroup) -------------
    idx_flat = _knn_idx(p, nsample).reshape(N * nsample, 1)

    # ---- pass 2: attention + epilogue (gather happens inside the kernel) -----
    attn_names = ("wp1f", "bp1f", "wp2", "bp2", "bnw1_s", "bnw1_b",
                  "ww1f", "bw1f", "ww2", "bw2", "expand",
                  "bn2_s", "bn2_b", "w3f", "b3f")
    in_specs = [
        pl.BlockSpec((tile_n * nsample, 1), lambda i: (i, 0)),     # idx (row-tiled)
        pl.BlockSpec((N, 3 * cpad), lambda i: (0, 0)),             # QKV table (resident)
        pl.BlockSpec((N, 3), lambda i: (0, 0)),                    # point table (resident)
        pl.BlockSpec((tile_n, 3), lambda i: (i, 0)),               # query centers
        row_spec(Cin),                                             # identity (residual)
    ] + [full_spec(fp[k]) for k in attn_names]

    x_out = pl.pallas_call(
        _attn_kernel,
        grid=grid,
        in_specs=in_specs,
        out_specs=pl.BlockSpec((tile_n, C), lambda i: (i, 0)),
        out_shape=jax.ShapeDtypeStruct((N, C), jnp.float32),
        compiler_params=cparams,
    )(idx_flat, qkv, p, p, x, *[fp[k] for k in attn_names])

    return p, x_out, o


# --------------------------------------------------------------------------
# Deterministic parameter init (synthetic; shapes follow the PyTorch __init__)
# --------------------------------------------------------------------------
def init_params(key, in_planes, planes, share_planes):
    C = planes
    cs = C // share_planes
    ks = iter(jax.random.split(key, 32))

    def lin_w(fi, fo):
        return jax.random.normal(next(ks), (fi, fo), jnp.float32) / jnp.sqrt(fi)

    def lin_b(fo):
        return 0.05 * jax.random.normal(next(ks), (1, fo), jnp.float32)

    def bn(n):
        k1, k2, k3, k4 = jax.random.split(next(ks), 4)
        gamma = 1.0 + 0.1 * jax.random.normal(k1, (n,), jnp.float32)
        beta = 0.05 * jax.random.normal(k2, (n,), jnp.float32)
        mean = 0.05 * jax.random.normal(k3, (n,), jnp.float32)
        var = 0.9 + 0.2 * jax.random.uniform(k4, (n,), jnp.float32)
        return _bn_affine(gamma, beta, mean, var)

    prm = {}
    prm["w1"] = lin_w(in_planes, C)                       # linear1 (no bias)
    prm["bn1_s"], prm["bn1_b"] = bn(C)
    prm["wq"], prm["bq"] = lin_w(C, C), lin_b(C)
    prm["wk"], prm["bk"] = lin_w(C, C), lin_b(C)
    prm["wv"], prm["bv"] = lin_w(C, C), lin_b(C)
    prm["wp1"], prm["bp1"] = lin_w(3, 3), lin_b(3)        # linear_p[0]
    prm["bnp_s"], prm["bnp_b"] = bn(3)                    # linear_p[1]
    prm["wp2"], prm["bp2"] = lin_w(3, C), lin_b(C)        # linear_p[3]
    prm["bnw1_s"], prm["bnw1_b"] = bn(C)                  # linear_w[0]
    prm["ww1"], prm["bw1"] = lin_w(C, cs), lin_b(cs)      # linear_w[2]
    prm["bnw2_s"], prm["bnw2_b"] = bn(cs)                 # linear_w[3]
    prm["ww2"], prm["bw2"] = lin_w(cs, cs), lin_b(cs)     # linear_w[5]
    prm["bn2_s"], prm["bn2_b"] = bn(C)
    prm["w3"] = lin_w(C, C)                               # linear3 (no bias)
    prm["bn3_s"], prm["bn3_b"] = bn(C)
    return prm


# --------------------------------------------------------------------------
# Pure-JAX reference (module math, un-folded params) for a sanity check
# --------------------------------------------------------------------------
def reference(p, x, params, share_planes, nsample):
    y = jnp.maximum((x @ params["w1"]) * params["bn1_s"] + params["bn1_b"], 0.0)
    xq = y @ params["wq"] + params["bq"]
    xk = y @ params["wk"] + params["bk"]
    xv = y @ params["wv"] + params["bv"]

    idx = _knn_idx(p, nsample)
    p_r = p[idx] - p[:, None, :]
    xk_g, xv_g = xk[idx], xv[idx]

    h = p_r @ params["wp1"] + params["bp1"]
    h = jnp.maximum(h * params["bnp_s"] + params["bnp_b"], 0.0)
    p_emb = h @ params["wp2"] + params["bp2"]

    w = xk_g - xq[:, None, :] + p_emb
    w = jnp.maximum(w * params["bnw1_s"] + params["bnw1_b"], 0.0)
    w = w @ params["ww1"] + params["bw1"]
    w = jnp.maximum(w * params["bnw2_s"] + params["bnw2_b"], 0.0)
    w = w @ params["ww2"] + params["bw2"]
    w = jax.nn.softmax(w, axis=1)

    n, ns, C = xv_g.shape
    s = share_planes
    val = (xv_g + p_emb).reshape(n, ns, s, C // s)
    agg = jnp.sum(val * w[:, :, None, :], axis=1).reshape(n, C)

    agg = jnp.maximum(agg * params["bn2_s"] + params["bn2_b"], 0.0)
    out = (agg @ params["w3"]) * params["bn3_s"] + params["bn3_b"]
    return jnp.maximum(out + x, 0.0)


if __name__ == "__main__":
    N, in_planes, planes, share_planes, nsample = 256, 32, 32, 8, 8
    tile_n = 64   # grid of 4 (even) keeps both v7x TensorCores busy

    key = jax.random.PRNGKey(0)
    kp, kx, kparam = jax.random.split(key, 3)
    p = jax.random.normal(kp, (N, 3), jnp.float32)
    x = 0.5 * jax.random.normal(kx, (N, in_planes), jnp.float32)
    o = jnp.array([N], jnp.int32)            # single batch segment offset

    params = init_params(kparam, in_planes, planes, share_planes)
    x_ref = reference(p, x, params, share_planes, nsample)

    # f32 compute path: strict numeric check against the pure-JAX reference.
    _, x_f32, _ = point_transformer_block(
        p, x, o, params, share_planes=share_planes, nsample=nsample,
        tile_n=tile_n, compute_dtype=jnp.float32)
    x_f32 = jax.block_until_ready(x_f32)
    assert x_f32.shape == (N, planes)
    assert bool(jnp.all(jnp.isfinite(x_f32)))
    err = float(jnp.max(jnp.abs(x_f32 - x_ref)))
    assert err < 1e-2, f"f32 max abs err {err}"

    # bf16 compute path (native MXU rate, half the HBM/VMEM for the QKV table).
    _, x_bf16, _ = point_transformer_block(
        p, x, o, params, share_planes=share_planes, nsample=nsample,
        tile_n=tile_n, compute_dtype=jnp.bfloat16)
    x_bf16 = jax.block_until_ready(x_bf16)
    assert bool(jnp.all(jnp.isfinite(x_bf16)))
    err_bf = float(jnp.max(jnp.abs(x_bf16 - x_ref)))
    assert err_bf < 0.15, f"bf16 max abs err {err_bf}"

    print("KERNEL_OK")
</pallas_src>

<mosaic_0001>
module attributes {stable_mosaic.version = 11 : i64} {
  func.func @_qkv_kernel(%arg0: i32, %arg1: memref<64x32xf32, #tpu.memory_space<vmem>>, %arg2: memref<32x32xf32, #tpu.memory_space<vmem>>, %arg3: memref<1x32xf32, #tpu.memory_space<vmem>>, %arg4: memref<32x384xf32, #tpu.memory_space<vmem>>, %arg5: memref<1x384xf32, #tpu.memory_space<vmem>>, %arg6: memref<64x384xf32, #tpu.memory_space<vmem>>) attributes {dimension_semantics = [#tpu.dimension_semantics<parallel>], iteration_bounds = array<i64: 4>, scalar_prefetch = 0 : i64, scratch_operands = 0 : i64, tpu.core_type = #tpu.core_type<tc>, window_params = [{transform_indices = @transform_0, window_bounds = array<i64: 64, 32>}, {pipeline_mode = #tpu.pipeline_mode<synchronous>, transform_indices = @transform_1, window_bounds = array<i64: 32, 32>}, {pipeline_mode = #tpu.pipeline_mode<synchronous>, transform_indices = @transform_2, window_bounds = array<i64: 1, 32>}, {pipeline_mode = #tpu.pipeline_mode<synchronous>, transform_indices = @transform_3, window_bounds = array<i64: 32, 384>}, {pipeline_mode = #tpu.pipeline_mode<synchronous>, transform_indices = @transform_4, window_bounds = array<i64: 1, 384>}, {transform_indices = @transform_5, window_bounds = array<i64: 64, 384>}]} {
    %c0 = arith.constant 0 : index
    %c0_0 = arith.constant 0 : index
    %0 = vector.load %arg1[%c0, %c0_0] : memref<64x32xf32, #tpu.memory_space<vmem>>, vector<64x32xf32>
    %c0_1 = arith.constant 0 : index
    %c0_2 = arith.constant 0 : index
    %1 = vector.load %arg2[%c0_1, %c0_2] : memref<32x32xf32, #tpu.memory_space<vmem>>, vector<32x32xf32>
    %cst = arith.constant dense<0.000000e+00> : vector<64x32xf32>
    %2 = tpu.matmul %0, %1, %cst {dimension_numbers = #tpu.dot_dimension_numbers<[1], [0], [0], [1], [0, 0, 1, 1], [], []>} : vector<64x32xf32>, vector<32x32xf32>, vector<64x32xf32> -> vector<64x32xf32>
    %c0_3 = arith.constant 0 : index
    %c0_4 = arith.constant 0 : index
    %3 = vector.load %arg3[%c0_3, %c0_4] : memref<1x32xf32, #tpu.memory_space<vmem>>, vector<1x32xf32>
    %4 = vector.broadcast %3 : vector<1x32xf32> to vector<64x32xf32>
    %5 = arith.addf %2, %4 : vector<64x32xf32>
    %cst_5 = arith.constant 0.000000e+00 : f32
    %6 = vector.broadcast %cst_5 : f32 to vector<64x32xf32>
    %7 = arith.maximumf %5, %6 : vector<64x32xf32>
    %c0_6 = arith.constant 0 : index
    %c0_7 = arith.constant 0 : index
    %8 = vector.load %arg4[%c0_6, %c0_7] : memref<32x384xf32, #tpu.memory_space<vmem>>, vector<32x384xf32>
    %cst_8 = arith.constant dense<0.000000e+00> : vector<64x384xf32>
    %9 = tpu.matmul %7, %8, %cst_8 {dimension_numbers = #tpu.dot_dimension_numbers<[1], [0], [0], [1], [0, 0, 1, 1], [], []>} : vector<64x32xf32>, vector<32x384xf32>, vector<64x384xf32> -> vector<64x384xf32>
    %c0_9 = arith.constant 0 : index
    %c0_10 = arith.constant 0 : index
    %10 = vector.load %arg5[%c0_9, %c0_10] : memref<1x384xf32, #tpu.memory_space<vmem>>, vector<1x384xf32>
    %11 = vector.broadcast %10 : vector<1x384xf32> to vector<64x384xf32>
    %12 = arith.addf %9, %11 : vector<64x384xf32>
    %c0_11 = arith.constant 0 : index
    %c0_12 = arith.constant 0 : index
    %13 = vector.load %arg6[%c0_11, %c0_12] : memref<64x384xf32, #tpu.memory_space<vmem>>, vector<64x384xf32>
    tpu.vector_store %arg6[%c0_11, %c0_12], %12 {strides = array<i32>} : memref<64x384xf32, #tpu.memory_space<vmem>>, vector<64x384xf32>,
    return
  }
  func.func @transform_0(%arg0: i32) -> (i32, i32) {
    %c0_i32 = arith.constant 0 : i32
    %c0_i32_0 = arith.constant 0 : i32
    return %arg0, %c0_i32 : i32, i32
  }
  func.func @transform_1(%arg0: i32) -> (i32, i32) {
    %c0_i32 = arith.constant 0 : i32
    %c0_i32_0 = arith.constant 0 : i32
    %c0_i32_1 = arith.constant 0 : i32
    return %c0_i32, %c0_i32_0 : i32, i32
  }
  func.func @transform_2(%arg0: i32) -> (i32, i32) {
    %c0_i32 = arith.constant 0 : i32
    %c0_i32_0 = arith.constant 0 : i32
    %c0_i32_1 = arith.constant 0 : i32
    return %c0_i32, %c0_i32_0 : i32, i32
  }
  func.func @transform_3(%arg0: i32) -> (i32, i32) {
    %c0_i32 = arith.constant 0 : i32
    %c0_i32_0 = arith.constant 0 : i32
    %c0_i32_1 = arith.constant 0 : i32
    return %c0_i32, %c0_i32_0 : i32, i32
  }
  func.func @transform_4(%arg0: i32) -> (i32, i32) {
    %c0_i32 = arith.constant 0 : i32
    %c0_i32_0 = arith.constant 0 : i32
    %c0_i32_1 = arith.constant 0 : i32
    return %c0_i32, %c0_i32_0 : i32, i32
  }
  func.func @transform_5(%arg0: i32) -> (i32, i32) {
    %c0_i32 = arith.constant 0 : i32
    %c0_i32_0 = arith.constant 0 : i32
    return %arg0, %c0_i32 : i32, i32
  }
}

</mosaic_0001>

<llo_original>
// kernel: tpu_custom_call.1
$region0: #{tpu_custom_call.1}
  #allocation0 [shape = 'u32[]', space=smem, size = 0x4, offset = 0x4, fixed_abs, tag = 'smem constant byte address 0x4 - core index']
  #allocation1 [shape = 'u32[144,128]{1,0:T(1,128)}', space=vmem, size = 0x12000, scoped, tag = 'internal scratch']
  %s0 = inlined_call_operand.hbm [shape: f32[256,32], index: 0, kind: input, shape index: {}]
  %s1 = inlined_call_operand.hbm [shape: f32[32,32], index: 1, kind: input, shape index: {}]
  %s2 = inlined_call_operand.hbm [shape: f32[1,32], index: 2, kind: input, shape index: {}]
  %s3 = inlined_call_operand.hbm [shape: f32[32,384], index: 3, kind: input, shape index: {}]
  %s4 = inlined_call_operand.hbm [shape: f32[1,384], index: 4, kind: input, shape index: {}]
  %s5 = inlined_call_operand.hbm [shape: f32[256,384], index: 5, kind: output, shape index: {}]
  %s6 = sld [smem:[#allocation0]]
  $region73: #{tpu_custom_call.1} parent=0
    _
  %s8 = ssub.s32 1, %s6
  %s9 = scalar_select 0, %s8, %s6
  $region1: #{tpu_custom_call.1} parent=0
    #allocation2 [shape = 'u8[65536]{0}', space=vmem, size = 0x10000, scoped, tag = 'input window, operand 0']
    #allocation3 [shape = 's32[2]{0}', space=sflag, size = 0x8, scoped, tag = 'scoped memory for tpu_custom_call.1']
    #allocation4 [shape = 's32[2]{0}', space=sflag, size = 0x8, scoped, tag = 'scoped memory for tpu_custom_call.1']
    #allocation5 [shape = 'u8[16384]{0}', space=vmem, size = 0x4000, scoped, tag = 'input window, operand 1, single buffered']
    #allocation6 [shape = 's32[1]{0}', space=sflag, size = 0x4, scoped, tag = 'scoped memory for tpu_custom_call.1']
    #allocation7 [shape = 'u8[512]{0}', space=vmem, size = 0x400, scoped, tag = 'input window, operand 2, single buffered']
    #allocation8 [shape = 'u8[49152]{0}', space=vmem, size = 0xc000, scoped, tag = 'input window, operand 3, single buffered']
    #allocation9 [shape = 's32[1]{0}', space=sflag, size = 0x4, scoped, tag = 'scoped memory for tpu_custom_call.1']
    #allocation10 [shape = 'u8[1536]{0}', space=vmem, size = 0x800, scoped, tag = 'input window, operand 4, single buffered']
    #allocation11 [shape = 'u8[196608]{0}', space=vmem, size = 0x30000, scoped, tag = 'output window, operand 0']
    %10 = vsyncpa [#allocation3], 0
    %s11 = scalar_lea.sflag [#allocation3], 1
    %12 = vsyncpa %s11, 0
    %13 = vsyncpa [#allocation6], 0
    %14 = vsyncpa [#allocation9], 0
    %15 = vsyncpa [#allocation4], 0
    %s16 = scalar_lea.sflag [#allocation4], 1
    %17 = vsyncpa %s16, 0
    loop: start=0, step=1, limit=6
    $region2: #{tpu_custom_call.1} parent=1 // loop_pre_header
      _
    $region3: #{tpu_custom_call.1} parent=1 // loop_header
      %s19 = sphi 0, %s23
      %p20 = scmp.ge.s32.totalorder %s19, 6
      %s29 = sphi 0, %s31
      %s32 = sphi 0, %s29
      %s33 = sphi 0, %s32
      %s49 = sphi 0, %s33
      %s53 = sphi 0, %s53
      %s55 = sphi 0, %s53
      %s56 = sphi 0, %s55
      %s70 = sphi 0, %s56
      %s74 = sphi 0, %s74
      %s76 = sphi 0, %s74
      %s77 = sphi 0, %s76
      %s91 = sphi 0, %s77
      %s95 = sphi 0, %s95
      %s97 = sphi 0, %s95
      %s98 = sphi 0, %s97
      %s112 = sphi 0, %s98
      %s116 = sphi 0, %s116
      %s118 = sphi 0, %s116
      %s119 = sphi 0, %s118
      %s133 = sphi 0, %s119
      %s139 = sphi 0, %s141
      %s142 = sphi 0, %s139
      %s143 = sphi 0, %s142
      %s159 = sphi 0, %s143
    $region4: #{tpu_custom_call.1} parent=1 // loop_header_branch
      %22 = sbr.rel (%p20) target = $region8
    $region5: #{tpu_custom_call.1} parent=1 // loop_body
      %s24 = ssub.s32 %s19, 1
      %s25 = ssub.s32 %s19, 2
      %s26 = sadd.s32 %s19, 1
      %s27 = ssub.s32 %s19, %s26
      %p28 = scmp.eq.s32.totalorder %s27, 0
      %s30 = sadd.s32 %s29, 1
      %s31 = scalar_select %p28, %s29, %s30
      %p34 = pneg %p28
      %p35 = scmp.eq.s32.totalorder %s19, 3
      %p36 = por %p34, %p35
      %p37 = scmp.ne.s32.totalorder %s29, %s32
      %p38 = scmp.eq.s32.totalorder %s19, 0
      %p39 = por %p37, %p38
      %p40 = scmp.ne.s32.totalorder %s29, %s32
      %p41 = scmp.eq.s32.totalorder %s24, 3
      %p42 = por %p40, %p41
      %p43 = scmp.ne.s32.totalorder %s32, %s33
      %p44 = scmp.eq.s32.totalorder %s24, 0
      %p45 = por %p43, %p44
      %p46 = scmp.ne.s32.totalorder %s32, %s33
      %p47 = scmp.eq.s32.totalorder %s25, 3
      %p48 = por %p46, %p47
      %p50 = scmp.ne.s32.totalorder %s33, %s49
      %p51 = scmp.eq.s32.totalorder %s25, 0
      %p52 = por %p50, %p51
      %s54 = sadd.s32 %s53, 1
      %p57 = scmp.eq.s32.totalorder %s19, 3
      %p58 = scmp.ne.s32.totalorder %s53, %s55
      %p59 = scmp.eq.s32.totalorder %s19, 0
      %p60 = por %p58, %p59
      %p61 = scmp.ne.s32.totalorder %s53, %s55
      %p62 = scmp.eq.s32.totalorder %s24, 3
      %p63 = por %p61, %p62
      %p64 = scmp.ne.s32.totalorder %s55, %s56
      %p65 = scmp.eq.s32.totalorder %s24, 0
      %p66 = por %p64, %p65
      %p67 = scmp.ne.s32.totalorder %s55, %s56
      %p68 = scmp.eq.s32.totalorder %s25, 3
      %p69 = por %p67, %p68
      %p71 = scmp.ne.s32.totalorder %s56, %s70
      %p72 = scmp.eq.s32.totalorder %s25, 0
      %p73 = por %p71, %p72
      %s75 = sadd.s32 %s74, 1
      %p78 = scmp.eq.s32.totalorder %s19, 3
      %p79 = scmp.ne.s32.totalorder %s74, %s76
      %p80 = scmp.eq.s32.totalorder %s19, 0
      %p81 = por %p79, %p80
      %p82 = scmp.ne.s32.totalorder %s74, %s76
      %p83 = scmp.eq.s32.totalorder %s24, 3
      %p84 = por %p82, %p83
      %p85 = scmp.ne.s32.totalorder %s76, %s77
      %p86 = scmp.eq.s32.totalorder %s24, 0
      %p87 = por %p85, %p86
      %p88 = scmp.ne.s32.totalorder %s76, %s77
      %p89 = scmp.eq.s32.totalorder %s25, 3
      %p90 = por %p88, %p89
      %p92 = scmp.ne.s32.totalorder %s77, %s91
      %p93 = scmp.eq.s32.totalorder %s25, 0
      %p94 = por %p92, %p93
      %s96 = sadd.s32 %s95, 1
      %p99 = scmp.eq.s32.totalorder %s19, 3
      %p100 = scmp.ne.s32.totalorder %s95, %s97
      %p101 = scmp.eq.s32.totalorder %s19, 0
      %p102 = por %p100, %p101
      %p103 = scmp.ne.s32.totalorder %s95, %s97
      %p104 = scmp.eq.s32.totalorder %s24, 3
      %p105 = por %p103, %p104
      %p106 = scmp.ne.s32.totalorder %s97, %s98
      %p107 = scmp.eq.s32.totalorder %s24, 0
      %p108 = por %p106, %p107
      %p109 = scmp.ne.s32.totalorder %s97, %s98
      %p110 = scmp.eq.s32.totalorder %s25, 3
      %p111 = por %p109, %p110
      %p113 = scmp.ne.s32.totalorder %s98, %s112
      %p114 = scmp.eq.s32.totalorder %s25, 0
      %p115 = por %p113, %p114
      %s117 = sadd.s32 %s116, 1
      %p120 = scmp.eq.s32.totalorder %s19, 3
      %p121 = scmp.ne.s32.totalorder %s116, %s118
      %p122 = scmp.eq.s32.totalorder %s19, 0
      %p123 = por %p121, %p122
      %p124 = scmp.ne.s32.totalorder %s116, %s118
      %p125 = scmp.eq.s32.totalorder %s24, 3
      %p126 = por %p124, %p125
      %p127 = scmp.ne.s32.totalorder %s118, %s119
      %p128 = scmp.eq.s32.totalorder %s24, 0
      %p129 = por %p127, %p128
      %p130 = scmp.ne.s32.totalorder %s118, %s119
      %p131 = scmp.eq.s32.totalorder %s25, 3
      %p132 = por %p130, %p131
      %p134 = scmp.ne.s32.totalorder %s119, %s133
      %p135 = scmp.eq.s32.totalorder %s25, 0
      %p136 = por %p134, %p135
      %s137 = ssub.s32 %s19, %s26
      %p138 = scmp.eq.s32.totalorder %s137, 0
      %s140 = sadd.s32 %s139, 1
      %s141 = scalar_select %p138, %s139, %s140
      %p144 = pneg %p138
      %p145 = scmp.eq.s32.totalorder %s19, 3
      %p146 = por %p144, %p145
      %p147 = scmp.ne.s32.totalorder %s139, %s142
      %p148 = scmp.eq.s32.totalorder %s19, 0
      %p149 = por %p147, %p148
      %p150 = scmp.ne.s32.totalorder %s139, %s142
      %p151 = scmp.eq.s32.totalorder %s24, 3
      %p152 = por %p150, %p151
      %p153 = scmp.ne.s32.totalorder %s142, %s143
      %p154 = scmp.eq.s32.totalorder %s24, 0
      %p155 = por %p153, %p154
      %p156 = scmp.ne.s32.totalorder %s142, %s143
      %p157 = scmp.eq.s32.totalorder %s25, 3
      %p158 = por %p156, %p157
      %p160 = scmp.ne.s32.totalorder %s143, %s159
      %p161 = scmp.eq.s32.totalorder %s25, 0
      %p162 = por %p160, %p161
      %p163 = scmp.le.s32.totalorder 1, %s19
      %p164 = scmp.lt.s32.totalorder %s19, 5
      %p165 = pnand %p163, %p164
      %p166 = pneg %p165
      // Predicated region
      $region9: #{tpu_custom_call.1} parent=5 // pred_check
        _
      $region10: #{tpu_custom_call.1} parent=5 // pred_check_branch
        %168 = sbr.rel (%p165) target = $region12
      $region11: #{tpu_custom_call.1} parent=5 // pred_region
        %s169 = ssub.s32 %s19, 1
        // Predicated region
        $region13: #{tpu_custom_call.1} parent=11 // pred_check
          %p170 = pneg %p66
        $region14: #{tpu_custom_call.1} parent=11 // pred_check_branch
          %172 = sbr.rel (%p170) target = $region16
        $region15: #{tpu_custom_call.1} parent=11 // pred_region
          %s174 = ssub.s32 512, 512
          %175 = vsyncadd [#allocation6], %s174
          %s176 = sshll.u32 [#allocation5], 4
          %s177 = int_to_ptr.vmem [resolvable:$true] %s176
          %182 = dma.hbm_to_vmem [thread:$0]  %s1, 512, %s177, [#allocation6], 128, 128, 8
        $region16: #{tpu_custom_call.1} parent=11 // pred_fallthru
          _
        // Predicated region
        $region17: #{tpu_custom_call.1} parent=11 // pred_check
          %p183 = pneg %p87
        $region18: #{tpu_custom_call.1} parent=11 // pred_check_branch
          %185 = sbr.rel (%p183) target = $region20
        $region19: #{tpu_custom_call.1} parent=11 // pred_region
          %s187 = ssub.s32 16, 16
          %188 = vsyncadd [#allocation6], %s187
          %s190 = sshll.u32 [#allocation7], 4
          %s191 = int_to_ptr.vmem [resolvable:$true] %s190
          %193 = dma.hbm_to_vmem [thread:$0]  %s2, 16, %s191, [#allocation6]
        $region20: #{tpu_custom_call.1} parent=11 // pred_fallthru
          _
        // Predicated region
        $region21: #{tpu_custom_call.1} parent=11 // pred_check
          %p194 = pneg %p108
        $region22: #{tpu_custom_call.1} parent=11 // pred_check_branch
          %196 = sbr.rel (%p194) target = $region24
        $region23: #{tpu_custom_call.1} parent=11 // pred_region
          %s198 = ssub.s32 1536, 1536
          %199 = vsyncadd [#allocation9], %s198
          %s200 = sshll.u32 [#allocation8], 4
          %s201 = int_to_ptr.vmem [resolvable:$true] %s200
          %206 = dma.hbm_to_vmem [thread:$0]  %s3, 1536, %s201, [#allocation9], 384, 384, 24
        $region24: #{tpu_custom_call.1} parent=11 // pred_fallthru
          _
        // Predicated region
        $region25: #{tpu_custom_call.1} parent=11 // pred_check
          %p207 = pneg %p129
        $region26: #{tpu_custom_call.1} parent=11 // pred_check_branch
          %209 = sbr.rel (%p207) target = $region28
        $region27: #{tpu_custom_call.1} parent=11 // pred_region
          %s211 = ssub.s32 48, 48
          %212 = vsyncadd [#allocation9], %s211
          %s214 = sshll.u32 [#allocation10], 4
          %s215 = int_to_ptr.vmem [resolvable:$true] %s214
          %217 = dma.hbm_to_vmem [thread:$0]  %s4, 48, %s215, [#allocation9]
        $region28: #{tpu_custom_call.1} parent=11 // pred_fallthru
          _
      $region12: #{tpu_custom_call.1} parent=5 // pred_fallthru
        _
      %p218 = scmp.lt.s32.totalorder %s19, 4
      // Predicated region
      $region29: #{tpu_custom_call.1} parent=5 // pred_check
        %p219 = pneg %p218
      $region30: #{tpu_custom_call.1} parent=5 // pred_check_branch
        %221 = sbr.rel (%p219) target = $region32
      $region31: #{tpu_custom_call.1} parent=5 // pred_region
        // Predicated region
        $region33: #{tpu_custom_call.1} parent=31 // pred_check
          %p222 = pneg %p39
        $region34: #{tpu_custom_call.1} parent=31 // pred_check_branch
          %224 = sbr.rel (%p222) target = $region36
        $region35: #{tpu_custom_call.1} parent=31 // pred_region
          %s225 = sand.u32 %s29, 1
          %s226 = scalar_lea.sflag [#allocation3], %s225
          %s227 = sand.u32 %s29, 1
          %s228 = smul.addr %s227, 64
          %s229 = scalar_lea.vmem [#allocation2], %s228
          %s230 = smul.u32 8, %s19
          %s232 = ssub.s32 1024, 1024
          %233 = vsyncadd %s226, %s232
          %s234 = smul.addr %s230, 128
          %s235 = scalar_lea.hbm %s0, %s234
          %s236 = sshll.u32 %s229, 4
          %s237 = int_to_ptr.vmem [resolvable:$true] %s236
          %242 = dma.hbm_to_vmem [thread:$0]  %s235, 1024, %s237, %s226, 128, 128, 8
        $region36: #{tpu_custom_call.1} parent=31 // pred_fallthru
          _
      $region32: #{tpu_custom_call.1} parent=5 // pred_fallthru
        _
      %p243 = scmp.le.s32.totalorder 1, %s19
      %p244 = scmp.lt.s32.totalorder %s19, 5
      %p245 = pnand %p243, %p244
      %p246 = pneg %p245
      // Predicated region
      $region37: #{tpu_custom_call.1} parent=5 // pred_check
        _
      $region38: #{tpu_custom_call.1} parent=5 // pred_check_branch
        %248 = sbr.rel (%p245) target = $region40
      $region39: #{tpu_custom_call.1} parent=5 // pred_region
        %s249 = ssub.s32 %s19, 1
        %s250 = sand.u32 %s32, 1
        %s251 = scalar_lea.sflag [#allocation3], %s250
        %s252 = sand.u32 %s32, 1
        %s253 = smul.addr %s252, 64
        %s254 = scalar_lea.vmem [#allocation2], %s253
        // Predicated region
        $region41: #{tpu_custom_call.1} parent=39 // pred_check
          %p255 = pneg %p45
        $region42: #{tpu_custom_call.1} parent=39 // pred_check_branch
          %257 = sbr.rel (%p255) target = $region44
        $region43: #{tpu_custom_call.1} parent=39 // pred_region
          %258 = dma.done %s251, 1024
        $region44: #{tpu_custom_call.1} parent=39 // pred_fallthru
          _
        // Predicated region
        $region45: #{tpu_custom_call.1} parent=39 // pred_check
          %p259 = pneg %p66
        $region46: #{tpu_custom_call.1} parent=39 // pred_check_branch
          %261 = sbr.rel (%p259) target = $region48
        $region47: #{tpu_custom_call.1} parent=39 // pred_region
          %262 = dma.done [#allocation6], 512
        $region48: #{tpu_custom_call.1} parent=39 // pred_fallthru
          _
        // Predicated region
        $region49: #{tpu_custom_call.1} parent=39 // pred_check
          %p263 = pneg %p87
        $region50: #{tpu_custom_call.1} parent=39 // pred_check_branch
          %265 = sbr.rel (%p263) target = $region52
        $region51: #{tpu_custom_call.1} parent=39 // pred_region
          %266 = dma.done [#allocation6], 16
        $region52: #{tpu_custom_call.1} parent=39 // pred_fallthru
          _
        // Predicated region
        $region53: #{tpu_custom_call.1} parent=39 // pred_check
          %p267 = pneg %p108
        $region54: #{tpu_custom_call.1} parent=39 // pred_check_branch
          %269 = sbr.rel (%p267) target = $region56
        $region55: #{tpu_custom_call.1} parent=39 // pred_region
          %270 = dma.done [#allocation9], 1536
        $region56: #{tpu_custom_call.1} parent=39 // pred_fallthru
          _
        // Predicated region
        $region57: #{tpu_custom_call.1} parent=39 // pred_check
          %p271 = pneg %p129
        $region58: #{tpu_custom_call.1} parent=39 // pred_check_branch
          %273 = sbr.rel (%p271) target = $region60
        $region59: #{tpu_custom_call.1} parent=39 // pred_region
          %274 = dma.done [#allocation9], 48
        $region60: #{tpu_custom_call.1} parent=39 // pred_fallthru
          _
        %s275 = sand.u32 %s32, 1
        %s276 = scalar_lea.sflag [#allocation3], %s275
        %s277 = sand.u32 %s32, 1
        %s278 = smul.addr %s277, 64
        %s279 = scalar_lea.vmem [#allocation2], %s278
        %p280 = pneg %p45
        %p281 = pneg %p42
        %p282 = pneg %p66
        %p283 = pneg %p63
        %p284 = pneg %p87
        %p285 = pneg %p84
        %p286 = pneg %p108
        %p287 = pneg %p105
        %p288 = pneg %p129
        %p289 = pneg %p126
        %p290 = pneg %p155
        %p291 = pneg %p152
        %s292 = sand.u32 %s142, 1
        %s293 = scalar_lea.sflag [#allocation4], %s292
        %s294 = sand.u32 %s142, 1
        %s295 = smul.addr %s294, 192
        %s296 = scalar_lea.vmem [#allocation11], %s295
        %s297 = smul.u32 8, %s24
        %s298 = smul.u32 8, %s24
        %v299 = vld [vmem:[%s254] sm:$0xff]
        %v300 = vld [vmem:[%s254 + $0x8] sm:$0xff]
        %v301 = vld [vmem:[%s254 + $0x10] sm:$0xff]
        %v302 = vld [vmem:[%s254 + $0x18] sm:$0xff]
        %v303 = vld [vmem:[%s254 + $0x20] sm:$0xff]
        %v304 = vld [vmem:[%s254 + $0x28] sm:$0xff]
        %v305 = vld [vmem:[%s254 + $0x30] sm:$0xff]
        %v306 = vld [vmem:[%s254 + $0x38] sm:$0xff]
        %v307 = vld [vmem:[#allocation5] sm:$0xff]
        %v308 = vld [vmem:[#allocation5 + $0x8] sm:$0xff]
        %v309 = vld [vmem:[#allocation5 + $0x10] sm:$0xff]
        %v310 = vld [vmem:[#allocation5 + $0x18] sm:$0xff]
        %v311 = vld [vmem:[#allocation7] sm:$0x1]
        %v313 = vlaneseq
        %v314 = vshrl.u32 %v313, 7
        %v315 = vsub.s32 0, %v314
        %v316 = vrot.slane %v311, %v315
        %vm318 = vcmask 261120
        %v320 = vsel %vm318, %v299, 0
        %v323 = vsel %vm318, %v300, 0
        %v326 = vsel %vm318, %v301, 0
        %v329 = vsel %vm318, %v302, 0
        %v332 = vsel %vm318, %v303, 0
        %v335 = vsel %vm318, %v304, 0
        %v338 = vsel %vm318, %v305, 0
        %v341 = vsel %vm318, %v306, 0
        %343 = vmatprep.subr.mxu0 0.0
        %344 = vmatpush1.msra.mxu0 %v307
        %345 = vmatprep.subr.mxu0 0.0
        %346 = vmatpush1.msra.mxu0 %v308
        %347 = vmatprep.subr.mxu0 0.0
        %348 = vmatpush1.msra.mxu0 %v309
        %349 = vmatprep.subr.mxu0 0.0
        %350 = vmatpush1.msra.mxu0 %v310
        %351 = vmatprep.subr.mxu0 0.0
        %352 = vmatpush1.msra.mxu0 0.0
        %353 = vmatprep.subr.mxu0 0.0
        %354 = vmatpush1.msra.mxu0 0.0
        %355 = vmatprep.subr.mxu0 0.0
        %356 = vmatpush1.msra.mxu0 0.0
        %357 = vmatprep.subr.mxu0 0.0
        %358 = vmatpush1.msra.mxu0 0.0
        %359 = vmatprep.subr.mxu0 0.0
        %360 = vmatpush1.msra.mxu0 0.0
        %361 = vmatprep.subr.mxu0 0.0
        %362 = vmatpush1.msra.mxu0 0.0
        %363 = vmatprep.subr.mxu0 0.0
        %364 = vmatpush1.msra.mxu0 0.0
        %365 = vmatprep.subr.mxu0 0.0
        %366 = vmatpush1.msra.mxu0 0.0
        %367 = vmatprep.subr.mxu0 0.0
        %368 = vmatpush1.msra.mxu0 0.0
        %369 = vmatprep.subr.mxu0 0.0
        %370 = vmatpush1.msra.mxu0 0.0
        %371 = vmatprep.subr.mxu0 0.0
        %372 = vmatpush1.msra.mxu0 0.0
        %373 = vmatprep.subr.mxu0 0.0
        %374 = vmatpush1.msra.mxu0 0.0
        %375 = vmatprep.subr.mxu0 0.0
        %376 = vmatpush1.msra.mxu0 0.0
        %377 = vmatprep.subr.mxu0 0.0
        %378 = vmatpush1.msra.mxu0 0.0
        %379 = vmatprep.subr.mxu0 0.0
        %380 = vmatpush1.msra.mxu0 0.0
        %381 = vmatprep.subr.mxu0 0.0
        %382 = vmatpush1.msra.mxu0 0.0
        %383 = vmatprep.subr.mxu0 0.0
        %384 = vmatpush1.msra.mxu0 0.0
        %385 = vmatprep.subr.mxu0 0.0
        %386 = vmatpush1.msra.mxu0 0.0
        %387 = vmatprep.subr.mxu0 0.0
        %388 = vmatpush1.msra.mxu0 0.0
        %389 = vmatprep.subr.mxu0 0.0
        %390 = vmatpush1.msra.mxu0 0.0
        %391 = vmatprep.subr.mxu0 0.0
        %392 = vmatpush1.msra.mxu0 0.0
        %393 = vmatprep.subr.mxu0 0.0
        %394 = vmatpush1.msra.mxu0 0.0
        %395 = vmatprep.subr.mxu0 0.0
        %396 = vmatpush1.msra.mxu0 0.0
        %397 = vmatprep.subr.mxu0 0.0
        %398 = vmatpush1.msra.mxu0 0.0
        %399 = vmatprep.subr.mxu0 0.0
        %400 = vmatpush1.msra.mxu0 0.0
        %401 = vmatprep.subr.mxu0 0.0
        %402 = vmatpush1.msra.mxu0 0.0
        %403 = vmatprep.subr.mxu0 0.0
        %404 = vmatpush1.msra.mxu0 0.0
        %405 = vmatprep.subr.mxu0 0.0
        %406 = vmatpush1.msra.mxu0 0.0
        %407 = vmatprep.mubr.f32.mxu0 0.0
        %408 = vmatmul.mubr.f32.gmra.mrb[0].mxu0 %v320
        %v409 = vpop.f32.mrb[0].mxu0
        %v410 = vadd.f32 %v316, %v409
        %v411 = vpop.f32.mrb[0].mxu0
        %412 = vmatprep.mubr.f32.mxu0 0.0
        %413 = vmatmul.mubr.f32.gmra.mrb[0].mxu0 %v323
        %v414 = vpop.f32.mrb[0].mxu0
        %v415 = vadd.f32 %v316, %v414
        %v416 = vpop.f32.mrb[0].mxu0
        %417 = vmatprep.mubr.f32.mxu0 0.0
        %418 = vmatmul.mubr.f32.gmra.mrb[0].mxu0 %v326
        %v419 = vpop.f32.mrb[0].mxu0
        %v420 = vadd.f32 %v316, %v419
        %v421 = vpop.f32.mrb[0].mxu0
        %422 = vmatprep.mubr.f32.mxu0 0.0
        %423 = vmatmul.mubr.f32.gmra.mrb[0].mxu0 %v329
        %v424 = vpop.f32.mrb[0].mxu0
        %v425 = vadd.f32 %v316, %v424
        %v426 = vpop.f32.mrb[0].mxu0
        %427 = vmatprep.mubr.f32.mxu0 0.0
        %428 = vmatmul.mubr.f32.gmra.mrb[0].mxu0 %v332
        %v429 = vpop.f32.mrb[0].mxu0
        %v430 = vadd.f32 %v316, %v429
        %v431 = vpop.f32.mrb[0].mxu0
        %432 = vmatprep.mubr.f32.mxu0 0.0
        %433 = vmatmul.mubr.f32.gmra.mrb[0].mxu0 %v335
        %v434 = vpop.f32.mrb[0].mxu0
        %v435 = vadd.f32 %v316, %v434
        %v436 = vpop.f32.mrb[0].mxu0
        %437 = vmatprep.mubr.f32.mxu0 0.0
        %438 = vmatmul.mubr.f32.gmra.mrb[0].mxu0 %v338
        %v439 = vpop.f32.mrb[0].mxu0
        %v440 = vadd.f32 %v316, %v439
        %v441 = vpop.f32.mrb[0].mxu0
        %442 = vmatprep.mubr.f32.mxu0 0.0
        %443 = vmatmul.mubr.f32.gmra.mrb[0].mxu0 %v341
        %v444 = vpop.f32.mrb[0].mxu0
        %v445 = vadd.f32 %v316, %v444
        %v446 = vpop.f32.mrb[0].mxu0
        %447 = vdwg.mxu0
        %v448 = vmax.f32 %v410, 0.0
        %v449 = vmax.f32 %v415, 0.0
        %v450 = vmax.f32 %v420, 0.0
        %v451 = vmax.f32 %v425, 0.0
        %v452 = vmax.f32 %v430, 0.0
        %v453 = vmax.f32 %v435, 0.0
        %v454 = vmax.f32 %v440, 0.0
        %v455 = vmax.f32 %v445, 0.0
        %v456 = vld [vmem:[#allocation8] sm:$0xff]
        %v457 = vld [vmem:[#allocation8 + $0x8] sm:$0xff]
        %v458 = vld [vmem:[#allocation8 + $0x10] sm:$0xff]
        %v459 = vld [vmem:[#allocation8 + $0x18] sm:$0xff]
        %v460 = vld [vmem:[#allocation8 + $0x20] sm:$0xff]
        %v461 = vld [vmem:[#allocation8 + $0x28] sm:$0xff]
        %v462 = vld [vmem:[#allocation8 + $0x30] sm:$0xff]
        %v463 = vld [vmem:[#allocation8 + $0x38] sm:$0xff]
        %v464 = vld [vmem:[#allocation8 + $0x40] sm:$0xff]
        %v465 = vld [vmem:[#allocation8 + $0x48] sm:$0xff]
        %v466 = vld [vmem:[#allocation8 + $0x50] sm:$0xff]
        %v467 = vld [vmem:[#allocation8 + $0x58] sm:$0xff]
        %v468 = vld [vmem:[#allocation10] sm:$0x7]
        %v470 = vlaneseq
        %v471 = vshrl.u32 %v470, 7
        %v472 = vsub.s32 0, %v471
        %v473 = vrot.slane %v468, %v472
        %v474 = vlaneseq
        %v475 = vshrl.u32 %v474, 7
        %v476 = vsub.s32 1, %v475
        %v477 = vrot.slane %v468, %v476
        %v478 = vlaneseq
        %v479 = vshrl.u32 %v478, 7
        %v480 = vsub.s32 2, %v479
        %v481 = vrot.slane %v468, %v480
        %v486 = vsel %vm318, %v448, 0
        %v489 = vsel %vm318, %v449, 0
        %v492 = vsel %vm318, %v450, 0
        %v495 = vsel %vm318, %v451, 0
        %v498 = vsel %vm318, %v452, 0
        %v501 = vsel %vm318, %v453, 0
        %v504 = vsel %vm318, %v454, 0
        %v507 = vsel %vm318, %v455, 0
        %509 = vmatprep.subr.mxu0 %v457
        %510 = vmatpush1.msra.mxu0 %v456
        %511 = vmatprep.subr.mxu0 %v460
        %512 = vmatpush1.msra.mxu0 %v459
        %513 = vmatprep.subr.mxu0 %v463
        %514 = vmatpush1.msra.mxu0 %v462
        %515 = vmatprep.subr.mxu0 %v466
        %516 = vmatpush1.msra.mxu0 %v465
        %517 = vmatprep.subr.mxu0 0.0
        %518 = vmatpush1.msra.mxu0 0.0
        %519 = vmatprep.subr.mxu0 0.0
        %520 = vmatpush1.msra.mxu0 0.0
        %521 = vmatprep.subr.mxu0 0.0
        %522 = vmatpush1.msra.mxu0 0.0
        %523 = vmatprep.subr.mxu0 0.0
        %524 = vmatpush1.msra.mxu0 0.0
        %525 = vmatprep.subr.mxu0 0.0
        %526 = vmatpush1.msra.mxu0 0.0
        %527 = vmatprep.subr.mxu0 0.0
        %528 = vmatpush1.msra.mxu0 0.0
        %529 = vmatprep.subr.mxu0 0.0
        %530 = vmatpush1.msra.mxu0 0.0
        %531 = vmatprep.subr.mxu0 0.0
        %532 = vmatpush1.msra.mxu0 0.0
        %533 = vmatprep.subr.mxu0 0.0
        %534 = vmatpush1.msra.mxu0 0.0
        %535 = vmatprep.subr.mxu0 0.0
        %536 = vmatpush1.msra.mxu0 0.0
        %537 = vmatprep.subr.mxu0 0.0
        %538 = vmatpush1.msra.mxu0 0.0
        %539 = vmatprep.subr.mxu0 0.0
        %540 = vmatpush1.msra.mxu0 0.0
        %541 = vmatprep.subr.mxu0 0.0
        %542 = vmatpush1.msra.mxu0 0.0
        %543 = vmatprep.subr.mxu0 0.0
        %544 = vmatpush1.msra.mxu0 0.0
        %545 = vmatprep.subr.mxu0 0.0
        %546 = vmatpush1.msra.mxu0 0.0
        %547 = vmatprep.subr.mxu0 0.0
        %548 = vmatpush1.msra.mxu0 0.0
        %549 = vmatprep.subr.mxu0 0.0
        %550 = vmatpush1.msra.mxu0 0.0
        %551 = vmatprep.subr.mxu0 0.0
        %552 = vmatpush1.msra.mxu0 0.0
        %553 = vmatprep.subr.mxu0 0.0
        %554 = vmatpush1.msra.mxu0 0.0
        %555 = vmatprep.subr.mxu0 0.0
        %556 = vmatpush1.msra.mxu0 0.0
        %557 = vmatprep.subr.mxu0 0.0
        %558 = vmatpush1.msra.mxu0 0.0
        %559 = vmatprep.subr.mxu0 0.0
        %560 = vmatpush1.msra.mxu0 0.0
        %561 = vmatprep.subr.mxu0 0.0
        %562 = vmatpush1.msra.mxu0 0.0
        %563 = vmatprep.subr.mxu0 0.0
        %564 = vmatpush1.msra.mxu0 0.0
        %565 = vmatprep.subr.mxu0 0.0
        %566 = vmatpush1.msra.mxu0 0.0
        %567 = vmatprep.subr.mxu0 0.0
        %568 = vmatpush1.msra.mxu0 0.0
        %569 = vmatprep.subr.mxu0 0.0
        %570 = vmatpush1.msra.mxu0 0.0
        %571 = vmatprep.subr.mxu0 0.0
        %572 = vmatpush1.msra.mxu0 0.0
        %573 = vmatprep.mubr.f32.mxu0 0.0
        %574 = vmatmul.mubr.f32.gmra.mrb[0].mxu0 %v486
        %v575 = vpop.f32.mrb[0].mxu0
        %v576 = vadd.f32 %v473, %v575
        %v577 = vpop.f32.mrb[0].mxu0
        %v578 = vadd.f32 %v477, %v577
        %579 = vmatprep.mubr.f32.mxu0 0.0
        %580 = vmatmul.mubr.f32.gmra.mrb[0].mxu0 %v489
        %v581 = vpop.f32.mrb[0].mxu0
        %v582 = vadd.f32 %v473, %v581
        %v583 = vpop.f32.mrb[0].mxu0
        %v584 = vadd.f32 %v477, %v583
        %585 = vmatprep.mubr.f32.mxu0 0.0
        %586 = vmatmul.mubr.f32.gmra.mrb[0].mxu0 %v492
        %v587 = vpop.f32.mrb[0].mxu0
        %v588 = vadd.f32 %v473, %v587
        %v589 = vpop.f32.mrb[0].mxu0
        %v590 = vadd.f32 %v477, %v589
        %591 = vmatprep.mubr.f32.mxu0 0.0
        %592 = vmatmul.mubr.f32.gmra.mrb[0].mxu0 %v495
        %v593 = vpop.f32.mrb[0].mxu0
        %v594 = vadd.f32 %v473, %v593
        %v595 = vpop.f32.mrb[0].mxu0
        %v596 = vadd.f32 %v477, %v595
        %597 = vmatprep.mubr.f32.mxu0 0.0
        %598 = vmatmul.mubr.f32.gmra.mrb[0].mxu0 %v498
        %v599 = vpop.f32.mrb[0].mxu0
        %v600 = vadd.f32 %v473, %v599
        %v601 = vpop.f32.mrb[0].mxu0
        %v602 = vadd.f32 %v477, %v601
        %603 = vmatprep.mubr.f32.mxu0 0.0
        %604 = vmatmul.mubr.f32.gmra.mrb[0].mxu0 %v501
        %v605 = vpop.f32.mrb[0].mxu0
        %v606 = vadd.f32 %v473, %v605
        %v607 = vpop.f32.mrb[0].mxu0
        %v608 = vadd.f32 %v477, %v607
        %609 = vmatprep.mubr.f32.mxu0 0.0
        %610 = vmatmul.mubr.f32.gmra.mrb[0].mxu0 %v504
        %v611 = vpop.f32.mrb[0].mxu0
        %v612 = vadd.f32 %v473, %v611
        %v613 = vpop.f32.mrb[0].mxu0
        %v614 = vadd.f32 %v477, %v613
        %615 = vmatprep.mubr.f32.mxu0 0.0
        %616 = vmatmul.mubr.f32.gmra.mrb[0].mxu0 %v507
        %v617 = vpop.f32.mrb[0].mxu0
        %v618 = vadd.f32 %v473, %v617
        %v619 = vpop.f32.mrb[0].mxu0
        %v620 = vadd.f32 %v477, %v619
        %621 = vdwg.mxu0
        %622 = vmatprep.subr.mxu0 0.0
        %623 = vmatpush1.msra.mxu0 %v458
        %624 = vmatprep.subr.mxu0 0.0
        %625 = vmatpush1.msra.mxu0 %v461
        %626 = vmatprep.subr.mxu0 0.0
        %627 = vmatpush1.msra.mxu0 %v464
        %628 = vmatprep.subr.mxu0 0.0
        %629 = vmatpush1.msra.mxu0 %v467
        %630 = vmatprep.subr.mxu0 0.0
        %631 = vmatpush1.msra.mxu0 0.0
        %632 = vmatprep.subr.mxu0 0.0
        %633 = vmatpush1.msra.mxu0 0.0
        %634 = vmatprep.subr.mxu0 0.0
        %635 = vmatpush1.msra.mxu0 0.0
        %636 = vmatprep.subr.mxu0 0.0
        %637 = vmatpush1.msra.mxu0 0.0
        %638 = vmatprep.subr.mxu0 0.0
        %639 = vmatpush1.msra.mxu0 0.0
        %640 = vmatprep.subr.mxu0 0.0
        %641 = vmatpush1.msra.mxu0 0.0
        %642 = vmatprep.subr.mxu0 0.0
        %643 = vmatpush1.msra.mxu0 0.0
        %644 = vmatprep.subr.mxu0 0.0
        %645 = vmatpush1.msra.mxu0 0.0
        %646 = vmatprep.subr.mxu0 0.0
        %647 = vmatpush1.msra.mxu0 0.0
        %648 = vmatprep.subr.mxu0 0.0
        %649 = vmatpush1.msra.mxu0 0.0
        %650 = vmatprep.subr.mxu0 0.0
        %651 = vmatpush1.msra.mxu0 0.0
        %652 = vmatprep.subr.mxu0 0.0
        %653 = vmatpush1.msra.mxu0 0.0
        %654 = vmatprep.subr.mxu0 0.0
        %655 = vmatpush1.msra.mxu0 0.0
        %656 = vmatprep.subr.mxu0 0.0
        %657 = vmatpush1.msra.mxu0 0.0
        %658 = vmatprep.subr.mxu0 0.0
        %659 = vmatpush1.msra.mxu0 0.0
        %660 = vmatprep.subr.mxu0 0.0
        %661 = vmatpush1.msra.mxu0 0.0
        %662 = vmatprep.subr.mxu0 0.0
        %663 = vmatpush1.msra.mxu0 0.0
        %664 = vmatprep.subr.mxu0 0.0
        %665 = vmatpush1.msra.mxu0 0.0
        %666 = vmatprep.subr.mxu0 0.0
        %667 = vmatpush1.msra.mxu0 0.0
        %668 = vmatprep.subr.mxu0 0.0
        %669 = vmatpush1.msra.mxu0 0.0
        %670 = vmatprep.subr.mxu0 0.0
        %671 = vmatpush1.msra.mxu0 0.0
        %672 = vmatprep.subr.mxu0 0.0
        %673 = vmatpush1.msra.mxu0 0.0
        %674 = vmatprep.subr.mxu0 0.0
        %675 = vmatpush1.msra.mxu0 0.0
        %676 = vmatprep.subr.mxu0 0.0
        %677 = vmatpush1.msra.mxu0 0.0
        %678 = vmatprep.subr.mxu0 0.0
        %679 = vmatpush1.msra.mxu0 0.0
        %680 = vmatprep.subr.mxu0 0.0
        %681 = vmatpush1.msra.mxu0 0.0
        %682 = vmatprep.subr.mxu0 0.0
        %683 = vmatpush1.msra.mxu0 0.0
        %684 = vmatprep.subr.mxu0 0.0
        %685 = vmatpush1.msra.mxu0 0.0
        %686 = vmatprep.mubr.f32.mxu0 0.0
        %687 = vmatmul.mubr.f32.gmra.mrb[0].mxu0 %v486
        %v688 = vpop.f32.mrb[0].mxu0
        %v689 = vadd.f32 %v481, %v688
        %v690 = vpop.f32.mrb[0].mxu0
        %691 = vmatprep.mubr.f32.mxu0 0.0
        %692 = vmatmul.mubr.f32.gmra.mrb[0].mxu0 %v489
        %v693 = vpop.f32.mrb[0].mxu0
        %v694 = vadd.f32 %v481, %v693
        %v695 = vpop.f32.mrb[0].mxu0
        %696 = vmatprep.mubr.f32.mxu0 0.0
        %697 = vmatmul.mubr.f32.gmra.mrb[0].mxu0 %v492
        %v698 = vpop.f32.mrb[0].mxu0
        %v699 = vadd.f32 %v481, %v698
        %v700 = vpop.f32.mrb[0].mxu0
        %701 = vmatprep.mubr.f32.mxu0 0.0
        %702 = vmatmul.mubr.f32.gmra.mrb[0].mxu0 %v495
        %v703 = vpop.f32.mrb[0].mxu0
        %v704 = vadd.f32 %v481, %v703
        %v705 = vpop.f32.mrb[0].mxu0
        %706 = vmatprep.mubr.f32.mxu0 0.0
        %707 = vmatmul.mubr.f32.gmra.mrb[0].mxu0 %v498
        %v708 = vpop.f32.mrb[0].mxu0
        %v709 = vadd.f32 %v481, %v708
        %v710 = vpop.f32.mrb[0].mxu0
        %711 = vmatprep.mubr.f32.mxu0 0.0
        %712 = vmatmul.mubr.f32.gmra.mrb[0].mxu0 %v501
        %v713 = vpop.f32.mrb[0].mxu0
        %v714 = vadd.f32 %v481, %v713
        %v715 = vpop.f32.mrb[0].mxu0
        %716 = vmatprep.mubr.f32.mxu0 0.0
        %717 = vmatmul.mubr.f32.gmra.mrb[0].mxu0 %v504
        %v718 = vpop.f32.mrb[0].mxu0
        %v719 = vadd.f32 %v481, %v718
        %v720 = vpop.f32.mrb[0].mxu0
        %721 = vmatprep.mubr.f32.mxu0 0.0
        %722 = vmatmul.mubr.f32.gmra.mrb[0].mxu0 %v507
        %v723 = vpop.f32.mrb[0].mxu0
        %v724 = vadd.f32 %v481, %v723
        %v725 = vpop.f32.mrb[0].mxu0
        %726 = vdwg.mxu0
        %727 = vst [vmem:[%s296] sm:$0xff] %v576
        %728 = vst [vmem:[%s296 + $0x8] sm:$0xff] %v578
        %729 = vst [vmem:[%s296 + $0x10] sm:$0xff] %v689
        %730 = vst [vmem:[%s296 + $0x18] sm:$0xff] %v582
        %731 = vst [vmem:[%s296 + $0x20] sm:$0xff] %v584
        %732 = vst [vmem:[%s296 + $0x28] sm:$0xff] %v694
        %733 = vst [vmem:[%s296 + $0x30] sm:$0xff] %v588
        %734 = vst [vmem:[%s296 + $0x38] sm:$0xff] %v590
        %735 = vst [vmem:[%s296 + $0x40] sm:$0xff] %v699
        %736 = vst [vmem:[%s296 + $0x48] sm:$0xff] %v594
        %737 = vst [vmem:[%s296 + $0x50] sm:$0xff] %v596
        %738 = vst [vmem:[%s296 + $0x58] sm:$0xff] %v704
        %739 = vst [vmem:[%s296 + $0x60] sm:$0xff] %v600
        %740 = vst [vmem:[%s296 + $0x68] sm:$0xff] %v602
        %741 = vst [vmem:[%s296 + $0x70] sm:$0xff] %v709
        %742 = vst [vmem:[%s296 + $0x78] sm:$0xff] %v606
        %743 = vst [vmem:[%s296 + $0x80] sm:$0xff] %v608
        %744 = vst [vmem:[%s296 + $0x88] sm:$0xff] %v714
        %745 = vst [vmem:[%s296 + $0x90] sm:$0xff] %v612
        %746 = vst [vmem:[%s296 + $0x98] sm:$0xff] %v614
        %747 = vst [vmem:[%s296 + $0xa0] sm:$0xff] %v719
        %748 = vst [vmem:[%s296 + $0xa8] sm:$0xff] %v618
        %749 = vst [vmem:[%s296 + $0xb0] sm:$0xff] %v620
        %750 = vst [vmem:[%s296 + $0xb8] sm:$0xff] %v724
        %s751 = sand.u32 %s142, 1
        %s752 = scalar_lea.sflag [#allocation4], %s751
        %s753 = sand.u32 %s142, 1
        %s754 = smul.addr %s753, 192
        %s755 = scalar_lea.vmem [#allocation11], %s754
        // Predicated region
        $region61: #{tpu_custom_call.1} parent=39 // pred_check
          %p756 = pneg %p152
        $region62: #{tpu_custom_call.1} parent=39 // pred_check_branch
          %758 = sbr.rel (%p756) target = $region64
        $region63: #{tpu_custom_call.1} parent=39 // pred_region
          %s759 = smul.u32 8, %s24
          %s761 = ssub.s32 3072, 3072
          %762 = vsyncadd %s752, %s761
          %s763 = smul.addr %s759, 3
          %s764 = smul.addr %s763, 128
          %s765 = scalar_lea.hbm %s5, %s764
          %s766 = sshll.u32 %s755, 4
          %s767 = int_to_ptr.vmem [resolvable:$true] %s766
          %772 = dma.vmem_to_hbm [thread:$0]  %s767, 3072, %s765, %s752, 384, 384, 24
        $region64: #{tpu_custom_call.1} parent=39 // pred_fallthru
          _
      $region40: #{tpu_custom_call.1} parent=5 // pred_fallthru
        _
      %p773 = scmp.le.s32.totalorder 2, %s19
      // Predicated region
      $region65: #{tpu_custom_call.1} parent=5 // pred_check
        %p774 = pneg %p773
      $region66: #{tpu_custom_call.1} parent=5 // pred_check_branch
        %776 = sbr.rel (%p774) target = $region68
      $region67: #{tpu_custom_call.1} parent=5 // pred_region
        %s777 = ssub.s32 %s19, 2
        // Predicated region
        $region69: #{tpu_custom_call.1} parent=67 // pred_check
          %p778 = pneg %p158
        $region70: #{tpu_custom_call.1} parent=67 // pred_check_branch
          %780 = sbr.rel (%p778) target = $region72
        $region71: #{tpu_custom_call.1} parent=67 // pred_region
          %s781 = sand.u32 %s143, 1
          %s782 = scalar_lea.sflag [#allocation4], %s781
          %s783 = sand.u32 %s143, 1
          %s784 = smul.addr %s783, 192
          %s785 = scalar_lea.vmem [#allocation11], %s784
          %786 = dma.done %s782, 3072
        $region72: #{tpu_custom_call.1} parent=67 // pred_fallthru
          _
      $region68: #{tpu_custom_call.1} parent=5 // pred_fallthru
        _
    $region6: #{tpu_custom_call.1} parent=1 // loop_footer
      %s23 = sadd.s32 1, %s19
    $region7: #{tpu_custom_call.1} parent=1 // loop_footer_branch
      %18 = sbr.rel target = $region3
    $region8: #{tpu_custom_call.1} parent=1 // loop_exit
      _
    %787 = vsyncpa [#allocation3], 1
    %s788 = scalar_lea.sflag [#allocation3], 1
    %789 = vsyncpa %s788, 1
    %790 = vsyncpa [#allocation6], 1
    %791 = vsyncpa [#allocation9], 1
    %792 = vsyncpa [#allocation4], 1
    %s793 = scalar_lea.sflag [#allocation4], 1
    %794 = vsyncpa %s793, 1

</llo_original>
